<compile_context>
chip_gen: v6e
topology: v6e:2x2x1
jax: 0.10.0
libtpu: 0.0.40
codegen_flags: <defaults>
</compile_context>

<pallas_src>
import jax
import jax.numpy as jnp
from jax.experimental import pallas as pl
from jax.experimental.pallas import tpu as pltpu

IN_DIM = 36
HID_DIM = 10
OUT_DIM = 10

DEFAULT_TILE_B = 8192   # ~20 MiB of double-buffered, lane-padded VMEM tiles
MAX_TILE_B = 16384      # keeps pipeline buffers < 40 MiB (safe under v7x's 64 MiB VMEM)

_LANE = 128
_SUBLANE = 8


def _round_up(n, m):
    return ((n + m - 1) // m) * m


def perceptron_kernel(x_ref, w1_ref, b1_ref, w2_ref, b2_ref, o_ref):
    # Two MXU matmuls (f32 accumulation) + EUP sigmoid on resident VMEM tiles.
    x = x_ref[...]
    h = jnp.dot(x, w1_ref[...], preferred_element_type=jnp.float32) + b1_ref[...]
    h = jax.nn.sigmoid(h)  # f32 elementwise (safe on v5e: no bf16 VPU/EUP there)
    y = jnp.dot(h, w2_ref[...], preferred_element_type=jnp.float32) + b2_ref[...]
    o_ref[...] = y.astype(o_ref.dtype)


def perceptron_forward(x, w1, b1, w2, b2, *, tile_b=DEFAULT_TILE_B):
    """Forward pass. x: (B, 36) -> (B, 10), float32 output."""
    B = x.shape[0]

    # Batch tile: multiple of 8 (sublane), no larger than the sublane-rounded batch,
    # capped so double-buffered lane-padded tiles stay comfortably inside v7x VMEM.
    tb = _round_up(max(min(tile_b, MAX_TILE_B), _SUBLANE), _SUBLANE)
    tb = min(tb, _round_up(B, _SUBLANE))

    grid = (pl.cdiv(B, tb),)  # partial last block is padded on read / masked on write

    # VMEM budget: double-buffered x and out tiles, last dim lane-padded to 128.
    itemsize = jnp.dtype(jnp.float32).itemsize
    x_tile_bytes = tb * _round_up(IN_DIM, _LANE) * itemsize
    o_tile_bytes = tb * _round_up(OUT_DIM, _LANE) * itemsize
    vmem_limit = 2 * (x_tile_bytes + o_tile_bytes) + (4 << 20)  # + params/headroom
    vmem_limit = int(min(max(vmem_limit, 32 << 20), 48 << 20))  # <= 48 MiB (< v7x 64 MiB)

    out = pl.pallas_call(
        perceptron_kernel,
        out_shape=jax.ShapeDtypeStruct((B, OUT_DIM), jnp.float32),
        grid_spec=pltpu.PrefetchScalarGridSpec(
            num_scalar_prefetch=0,
            grid=grid,
            in_specs=[
                # x: one batch tile per grid step (auto double-buffered).
                pl.BlockSpec((tb, IN_DIM), lambda i: (i, 0)),
                # Parameters: constant index_map -> resident in VMEM across all steps.
                pl.BlockSpec((IN_DIM, HID_DIM), lambda i: (0, 0)),
                pl.BlockSpec((1, HID_DIM), lambda i: (0, 0)),
                pl.BlockSpec((HID_DIM, OUT_DIM), lambda i: (0, 0)),
                pl.BlockSpec((1, OUT_DIM), lambda i: (0, 0)),
            ],
            out_specs=pl.BlockSpec((tb, OUT_DIM), lambda i: (i, 0)),
        ),
        compiler_params=pltpu.CompilerParams(
            dimension_semantics=("parallel",),   # shards batch tiles across v7x's 2 TCs
            vmem_limit_bytes=vmem_limit,
        ),
    )(x, w1, b1, w2, b2)

    return out


def init_params(key):
    # Deterministic init mimicking nn.Linear defaults: U(-1/sqrt(fan_in), 1/sqrt(fan_in)).
    # Weights stored as (in_features, out_features) = transpose of PyTorch's (out, in);
    # biases kept 2-D (1, out_features) so they map to VMEM tiles and broadcast over batch.
    k1, k2, k3, k4 = jax.random.split(key, 4)
    bound1 = 1.0 / jnp.sqrt(IN_DIM)
    bound2 = 1.0 / jnp.sqrt(HID_DIM)
    w1 = jax.random.uniform(k1, (IN_DIM, HID_DIM), jnp.float32, -bound1, bound1)
    b1 = jax.random.uniform(k2, (1, HID_DIM), jnp.float32, -bound1, bound1)
    w2 = jax.random.uniform(k3, (HID_DIM, OUT_DIM), jnp.float32, -bound2, bound2)
    b2 = jax.random.uniform(k4, (1, OUT_DIM), jnp.float32, -bound2, bound2)
    return w1, b1, w2, b2


def reference(x, w1, b1, w2, b2):
    return jnp.dot(jax.nn.sigmoid(jnp.dot(x, w1) + b1), w2) + b2


if __name__ == "__main__":
    key = jax.random.PRNGKey(0)
    kp, kx1, kx2 = jax.random.split(key, 3)
    w1, b1, w2, b2 = init_params(kp)

    # 1) Small smoke test (single tile, tb clamped to the batch).
    B_small = 8
    x_small = jax.random.normal(kx1, (B_small, IN_DIM), jnp.float32)
    out_small = jax.block_until_ready(perceptron_forward(x_small, w1, b1, w2, b2))
    ref_small = reference(x_small, w1, b1, w2, b2)
    assert out_small.shape == (B_small, OUT_DIM)
    assert jnp.allclose(out_small, ref_small, atol=1e-5, rtol=1e-5)

    # 2) Ragged multi-tile batch: grid > 1 plus a masked partial edge block
    #    (no wrapper pad / slice — verifies cdiv-grid edge masking end to end).
    B_ragged = 300
    x_ragged = jax.random.normal(kx2, (B_ragged, IN_DIM), jnp.float32)
    out_ragged = jax.block_until_ready(
        perceptron_forward(x_ragged, w1, b1, w2, b2, tile_b=128))
    ref_ragged = reference(x_ragged, w1, b1, w2, b2)
    assert out_ragged.shape == (B_ragged, OUT_DIM)
    assert jnp.allclose(out_ragged, ref_ragged, atol=1e-5, rtol=1e-5)

    print("KERNEL_OK")
</pallas_src>

<mosaic_0001>
module attributes {stable_mosaic.version = 11 : i64} {
  func.func @perceptron_kernel(%arg0: i32, %arg1: memref<8x36xf32, #tpu.memory_space<vmem>>, %arg2: memref<36x10xf32, #tpu.memory_space<vmem>>, %arg3: memref<1x10xf32, #tpu.memory_space<vmem>>, %arg4: memref<10x10xf32, #tpu.memory_space<vmem>>, %arg5: memref<1x10xf32, #tpu.memory_space<vmem>>, %arg6: memref<8x10xf32, #tpu.memory_space<vmem>>) attributes {dimension_semantics = [#tpu.dimension_semantics<parallel>], iteration_bounds = array<i64: 1>, scalar_prefetch = 0 : i64, scratch_operands = 0 : i64, tpu.core_type = #tpu.core_type<tc>, window_params = [{transform_indices = @transform_0, window_bounds = array<i64: 8, 36>}, {pipeline_mode = #tpu.pipeline_mode<synchronous>, transform_indices = @transform_1, window_bounds = array<i64: 36, 10>}, {pipeline_mode = #tpu.pipeline_mode<synchronous>, transform_indices = @transform_2, window_bounds = array<i64: 1, 10>}, {pipeline_mode = #tpu.pipeline_mode<synchronous>, transform_indices = @transform_3, window_bounds = array<i64: 10, 10>}, {pipeline_mode = #tpu.pipeline_mode<synchronous>, transform_indices = @transform_4, window_bounds = array<i64: 1, 10>}, {transform_indices = @transform_5, window_bounds = array<i64: 8, 10>}]} {
    %c0 = arith.constant 0 : index
    %c0_0 = arith.constant 0 : index
    %0 = vector.load %arg1[%c0, %c0_0] : memref<8x36xf32, #tpu.memory_space<vmem>>, vector<8x36xf32>
    %c0_1 = arith.constant 0 : index
    %c0_2 = arith.constant 0 : index
    %1 = vector.load %arg2[%c0_1, %c0_2] : memref<36x10xf32, #tpu.memory_space<vmem>>, vector<36x10xf32>
    %cst = arith.constant dense<0.000000e+00> : vector<8x10xf32>
    %2 = tpu.matmul %0, %1, %cst {dimension_numbers = #tpu.dot_dimension_numbers<[1], [0], [0], [1], [0, 0, 1, 1], [], []>} : vector<8x36xf32>, vector<36x10xf32>, vector<8x10xf32> -> vector<8x10xf32>
    %c0_3 = arith.constant 0 : index
    %c0_4 = arith.constant 0 : index
    %3 = vector.load %arg3[%c0_3, %c0_4] : memref<1x10xf32, #tpu.memory_space<vmem>>, vector<1x10xf32>
    %4 = vector.broadcast %3 : vector<1x10xf32> to vector<8x10xf32>
    %5 = arith.addf %2, %4 : vector<8x10xf32>
    %6 = arith.negf %5 : vector<8x10xf32>
    %7 = math.exp %6 : vector<8x10xf32>
    %cst_5 = arith.constant 1.000000e+00 : f32
    %8 = vector.broadcast %cst_5 : f32 to vector<8x10xf32>
    %9 = arith.addf %8, %7 : vector<8x10xf32>
    %10 = arith.divf %8, %9 : vector<8x10xf32>
    %c0_6 = arith.constant 0 : index
    %c0_7 = arith.constant 0 : index
    %11 = vector.load %arg4[%c0_6, %c0_7] : memref<10x10xf32, #tpu.memory_space<vmem>>, vector<10x10xf32>
    %cst_8 = arith.constant dense<0.000000e+00> : vector<8x10xf32>
    %12 = tpu.matmul %10, %11, %cst_8 {dimension_numbers = #tpu.dot_dimension_numbers<[1], [0], [0], [1], [0, 0, 1, 1], [], []>} : vector<8x10xf32>, vector<10x10xf32>, vector<8x10xf32> -> vector<8x10xf32>
    %c0_9 = arith.constant 0 : index
    %c0_10 = arith.constant 0 : index
    %13 = vector.load %arg5[%c0_9, %c0_10] : memref<1x10xf32, #tpu.memory_space<vmem>>, vector<1x10xf32>
    %14 = vector.broadcast %13 : vector<1x10xf32> to vector<8x10xf32>
    %15 = arith.addf %12, %14 : vector<8x10xf32>
    %c0_11 = arith.constant 0 : index
    %c0_12 = arith.constant 0 : index
    %16 = vector.load %arg6[%c0_11, %c0_12] : memref<8x10xf32, #tpu.memory_space<vmem>>, vector<8x10xf32>
    tpu.vector_store %arg6[%c0_11, %c0_12], %15 {strides = array<i32>} : memref<8x10xf32, #tpu.memory_space<vmem>>, vector<8x10xf32>,
    return
  }
  func.func @transform_0(%arg0: i32) -> (i32, i32) {
    %c0_i32 = arith.constant 0 : i32
    %c0_i32_0 = arith.constant 0 : i32
    return %arg0, %c0_i32 : i32, i32
  }
  func.func @transform_1(%arg0: i32) -> (i32, i32) {
    %c0_i32 = arith.constant 0 : i32
    %c0_i32_0 = arith.constant 0 : i32
    %c0_i32_1 = arith.constant 0 : i32
    return %c0_i32, %c0_i32_0 : i32, i32
  }
  func.func @transform_2(%arg0: i32) -> (i32, i32) {
    %c0_i32 = arith.constant 0 : i32
    %c0_i32_0 = arith.constant 0 : i32
    %c0_i32_1 = arith.constant 0 : i32
    return %c0_i32, %c0_i32_0 : i32, i32
  }
  func.func @transform_3(%arg0: i32) -> (i32, i32) {
    %c0_i32 = arith.constant 0 : i32
    %c0_i32_0 = arith.constant 0 : i32
    %c0_i32_1 = arith.constant 0 : i32
    return %c0_i32, %c0_i32_0 : i32, i32
  }
  func.func @transform_4(%arg0: i32) -> (i32, i32) {
    %c0_i32 = arith.constant 0 : i32
    %c0_i32_0 = arith.constant 0 : i32
    %c0_i32_1 = arith.constant 0 : i32
    return %c0_i32, %c0_i32_0 : i32, i32
  }
  func.func @transform_5(%arg0: i32) -> (i32, i32) {
    %c0_i32 = arith.constant 0 : i32
    %c0_i32_0 = arith.constant 0 : i32
    return %arg0, %c0_i32 : i32, i32
  }
}

</mosaic_0001>

<llo_original>
// kernel: tpu_custom_call.1
$region0: #{tpu_custom_call.1}
  #allocation0 [shape = 'u32[]', space=smem, size = 0x4, offset = 0x4, fixed_abs, tag = 'smem constant byte address 0x4 - core index']
  #allocation1 [shape = 'u32[144,128]{1,0:T(1,128)}', space=vmem, size = 0x12000, scoped, tag = 'internal scratch']
  %s0 = inlined_call_operand.vmem [shape: f32[8,36], index: 0, kind: input, shape index: {}]
  %s1 = inlined_call_operand.vmem [shape: f32[36,10], index: 1, kind: input, shape index: {}]
  %s2 = inlined_call_operand.vmem [shape: f32[1,10], index: 2, kind: input, shape index: {}]
  %s3 = inlined_call_operand.vmem [shape: f32[10,10], index: 3, kind: input, shape index: {}]
  %s4 = inlined_call_operand.vmem [shape: f32[1,10], index: 4, kind: input, shape index: {}]
  %s5 = inlined_call_operand.hbm [shape: f32[8,10], index: 5, kind: output, shape index: {}]
  %s6 = sld [smem:[#allocation0]]
  $region30: #{tpu_custom_call.1} parent=0
    _
  %s8 = ssub.s32 1, %s6
  %s9 = scalar_select 0, %s8, %s6
  $region1: #{tpu_custom_call.1} parent=0
    #allocation2 [shape = 'u8[4096]{0}', space=vmem, size = 0x1000, scoped, tag = 'output window, operand 0, single buffered']
    #allocation3 [shape = 's32[1]{0}', space=sflag, size = 0x4, scoped, tag = 'scoped memory for tpu_custom_call.1']
    %10 = vsyncpa [#allocation3], 0
    // Predicated region
    $region2: #{tpu_custom_call.1} parent=1 // pred_check
      _
    $region3: #{tpu_custom_call.1} parent=1 // pred_check_branch
      %12 = sbr.rel (0) target = $region5
    $region4: #{tpu_custom_call.1} parent=1 // pred_region
      _
    $region5: #{tpu_custom_call.1} parent=1 // pred_fallthru
      _
    // Predicated region
    $region6: #{tpu_custom_call.1} parent=1 // pred_check
      _
    $region7: #{tpu_custom_call.1} parent=1 // pred_check_branch
      %14 = sbr.rel (0) target = $region9
    $region8: #{tpu_custom_call.1} parent=1 // pred_region
      _
    $region9: #{tpu_custom_call.1} parent=1 // pred_fallthru
      _
    // Predicated region
    $region10: #{tpu_custom_call.1} parent=1 // pred_check
      _
    $region11: #{tpu_custom_call.1} parent=1 // pred_check_branch
      %16 = sbr.rel (0) target = $region13
    $region12: #{tpu_custom_call.1} parent=1 // pred_region
      _
    $region13: #{tpu_custom_call.1} parent=1 // pred_fallthru
      _
    // Predicated region
    $region14: #{tpu_custom_call.1} parent=1 // pred_check
      _
    $region15: #{tpu_custom_call.1} parent=1 // pred_check_branch
      %18 = sbr.rel (0) target = $region17
    $region16: #{tpu_custom_call.1} parent=1 // pred_region
      _
    $region17: #{tpu_custom_call.1} parent=1 // pred_fallthru
      _
    // Predicated region
    $region18: #{tpu_custom_call.1} parent=1 // pred_check
      _
    $region19: #{tpu_custom_call.1} parent=1 // pred_check_branch
      %20 = sbr.rel (0) target = $region21
    $region20: #{tpu_custom_call.1} parent=1 // pred_region
      _
    $region21: #{tpu_custom_call.1} parent=1 // pred_fallthru
      _
    %v21 = vld [vmem:[%s0] sm:$0xff]
    %v22 = vld [vmem:[%s1] sm:$0xff]
    %v23 = vld [vmem:[%s1 + $0x8] sm:$0xff]
    %v24 = vld [vmem:[%s1 + $0x10] sm:$0xff]
    %v25 = vld [vmem:[%s1 + $0x18] sm:$0xff]
    %v26 = vld [vmem:[%s1 + $0x20] sm:$0xf]
    %v27 = vld [vmem:[%s2] sm:$0x1]
    %v29 = vlaneseq
    %v30 = vshrl.u32 %v29, 7
    %v31 = vsub.s32 0, %v30
    %v32 = vrot.slane %v27, %v31
    %vm34 = vcmask 293888
    %v36 = vsel %vm34, %v21, 0
    %vm38 = vcmask 1043456
    %v40 = vsel %vm38, %v26, 0
    %42 = vmatprep.subr.mxu0 0.0
    %43 = vmatpush1.msra.mxu0 0.0
    %44 = vmatprep.subr.mxu0 0.0
    %45 = vmatpush1.msra.mxu0 0.0
    %46 = vmatprep.subr.mxu0 0.0
    %47 = vmatpush1.msra.mxu0 0.0
    %48 = vmatprep.subr.mxu0 0.0
    %49 = vmatpush1.msra.mxu0 0.0
    %50 = vmatprep.subr.mxu0 0.0
    %51 = vmatpush1.msra.mxu0 0.0
    %52 = vmatprep.subr.mxu0 0.0
    %53 = vmatpush1.msra.mxu0 0.0
    %54 = vmatprep.subr.mxu0 0.0
    %55 = vmatpush1.msra.mxu0 0.0
    %56 = vmatprep.subr.mxu0 0.0
    %57 = vmatpush1.msra.mxu0 0.0
    %58 = vmatprep.subr.mxu0 0.0
    %59 = vmatpush1.msra.mxu0 0.0
    %60 = vmatprep.subr.mxu0 0.0
    %61 = vmatpush1.msra.mxu0 0.0
    %62 = vmatprep.subr.mxu0 0.0
    %63 = vmatpush1.msra.mxu0 0.0
    %64 = vmatprep.subr.mxu0 0.0
    %65 = vmatpush1.msra.mxu0 %v40
    %66 = vmatprep.subr.mxu0 0.0
    %67 = vmatpush1.msra.mxu0 %v25
    %68 = vmatprep.subr.mxu0 0.0
    %69 = vmatpush1.msra.mxu0 %v24
    %70 = vmatprep.subr.mxu0 0.0
    %71 = vmatpush1.msra.mxu0 %v23
    %72 = vmatprep.subr.mxu0 0.0
    %73 = vmatpush1.msra.mxu0 %v22
    %74 = vmatprep.subr.mxu0 0.0
    %75 = vmatpush2.msra.mxu0 0.0
    %76 = vmatprep.subr.mxu0 0.0
    %77 = vmatpush2.msra.mxu0 0.0
    %78 = vmatprep.subr.mxu0 0.0
    %79 = vmatpush2.msra.mxu0 0.0
    %80 = vmatprep.subr.mxu0 0.0
    %81 = vmatpush2.msra.mxu0 0.0
    %82 = vmatprep.subr.mxu0 0.0
    %83 = vmatpush2.msra.mxu0 0.0
    %84 = vmatprep.subr.mxu0 0.0
    %85 = vmatpush2.msra.mxu0 0.0
    %86 = vmatprep.subr.mxu0 0.0
    %87 = vmatpush2.msra.mxu0 0.0
    %88 = vmatprep.subr.mxu0 0.0
    %89 = vmatpush2.msra.mxu0 0.0
    %90 = vmatprep.subr.mxu0 0.0
    %91 = vmatpush2.msra.mxu0 0.0
    %92 = vmatprep.subr.mxu0 0.0
    %93 = vmatpush2.msra.mxu0 0.0
    %94 = vmatprep.subr.mxu0 0.0
    %95 = vmatpush2.msra.mxu0 0.0
    %96 = vmatprep.subr.mxu0 0.0
    %97 = vmatpush2.msra.mxu0 0.0
    %98 = vmatprep.subr.mxu0 0.0
    %99 = vmatpush2.msra.mxu0 0.0
    %100 = vmatprep.subr.mxu0 0.0
    %101 = vmatpush2.msra.mxu0 0.0
    %102 = vmatprep.subr.mxu0 0.0
    %103 = vmatpush2.msra.mxu0 0.0
    %104 = vmatprep.subr.mxu0 0.0
    %105 = vmatpush2.msra.mxu0 0.0
    %106 = vmatprep.mubr.f32.mxu0 0.0
    %107 = vmatmul.mubr.f32.gmra.mxu0 %v36
    %v108 = vpop.f32.mrf.mxu0
    %v109 = vadd.f32 %v32, %v108
    %v110 = vpop.f32.mrf.mxu0
    %111 = vdwg.mxu0
    %v112 = vxor.u32 %v109, 2147483648
    %v113 = vmul.f32 %v112, 1.442695
    %v114 = vpow.pop %v113
    %v115 = vadd.f32 %v114, 1.0
    %v116 = vrcp.pop %v115
    %v117 = vmul.f32 1.0, %v116
    %v118 = vld [vmem:[%s3] sm:$0xff]
    %v119 = vld [vmem:[%s3 + $0x8] sm:$0x3]
    %v120 = vld [vmem:[%s4] sm:$0x1]
    %v122 = vlaneseq
    %v123 = vshrl.u32 %v122, 7
    %v124 = vsub.s32 0, %v123
    %v125 = vrot.slane %v120, %v124
    %vm127 = vcmask 80896
    %v129 = vsel %vm127, %v117, 0
    %vm131 = vcmask 1041408
    %v133 = vsel %vm131, %v119, 0
    %135 = vmatprep.subr.mxu0 0.0
    %136 = vmatpush1.msra.mxu0 0.0
    %137 = vmatprep.subr.mxu0 0.0
    %138 = vmatpush1.msra.mxu0 0.0
    %139 = vmatprep.subr.mxu0 0.0
    %140 = vmatpush1.msra.mxu0 0.0
    %141 = vmatprep.subr.mxu0 0.0
    %142 = vmatpush1.msra.mxu0 0.0
    %143 = vmatprep.subr.mxu0 0.0
    %144 = vmatpush1.msra.mxu0 0.0
    %145 = vmatprep.subr.mxu0 0.0
    %146 = vmatpush1.msra.mxu0 0.0
    %147 = vmatprep.subr.mxu0 0.0
    %148 = vmatpush1.msra.mxu0 0.0
    %149 = vmatprep.subr.mxu0 0.0
    %150 = vmatpush1.msra.mxu0 0.0
    %151 = vmatprep.subr.mxu0 0.0
    %152 = vmatpush1.msra.mxu0 0.0
    %153 = vmatprep.subr.mxu0 0.0
    %154 = vmatpush1.msra.mxu0 0.0
    %155 = vmatprep.subr.mxu0 0.0
    %156 = vmatpush1.msra.mxu0 0.0
    %157 = vmatprep.subr.mxu0 0.0
    %158 = vmatpush1.msra.mxu0 0.0
    %159 = vmatprep.subr.mxu0 0.0
    %160 = vmatpush1.msra.mxu0 0.0
    %161 = vmatprep.subr.mxu0 0.0
    %162 = vmatpush1.msra.mxu0 0.0
    %163 = vmatprep.subr.mxu0 0.0
    %164 = vmatpush1.msra.mxu0 %v133
    %165 = vmatprep.subr.mxu0 0.0
    %166 = vmatpush1.msra.mxu0 %v118
    %167 = vmatprep.subr.mxu0 0.0
    %168 = vmatpush2.msra.mxu0 0.0
    %169 = vmatprep.subr.mxu0 0.0
    %170 = vmatpush2.msra.mxu0 0.0
    %171 = vmatprep.subr.mxu0 0.0
    %172 = vmatpush2.msra.mxu0 0.0
    %173 = vmatprep.subr.mxu0 0.0
    %174 = vmatpush2.msra.mxu0 0.0
    %175 = vmatprep.subr.mxu0 0.0
    %176 = vmatpush2.msra.mxu0 0.0
    %177 = vmatprep.subr.mxu0 0.0
    %178 = vmatpush2.msra.mxu0 0.0
    %179 = vmatprep.subr.mxu0 0.0
    %180 = vmatpush2.msra.mxu0 0.0
    %181 = vmatprep.subr.mxu0 0.0
    %182 = vmatpush2.msra.mxu0 0.0
    %183 = vmatprep.subr.mxu0 0.0
    %184 = vmatpush2.msra.mxu0 0.0
    %185 = vmatprep.subr.mxu0 0.0
    %186 = vmatpush2.msra.mxu0 0.0
    %187 = vmatprep.subr.mxu0 0.0
    %188 = vmatpush2.msra.mxu0 0.0
    %189 = vmatprep.subr.mxu0 0.0
    %190 = vmatpush2.msra.mxu0 0.0
    %191 = vmatprep.subr.mxu0 0.0
    %192 = vmatpush2.msra.mxu0 0.0
    %193 = vmatprep.subr.mxu0 0.0
    %194 = vmatpush2.msra.mxu0 0.0
    %195 = vmatprep.subr.mxu0 0.0
    %196 = vmatpush2.msra.mxu0 0.0
    %197 = vmatprep.subr.mxu0 0.0
    %198 = vmatpush2.msra.mxu0 0.0
    %199 = vmatprep.mubr.f32.mxu0 0.0
    %200 = vmatmul.mubr.f32.gmra.mxu0 %v129
    %v201 = vpop.f32.mrf.mxu0
    %v202 = vadd.f32 %v125, %v201
    %v203 = vpop.f32.mrf.mxu0
    %204 = vdwg.mxu0
    %205 = vst.msk [vmem:[#allocation2] sm:$0xff] %vm127, %v202
    // Predicated region
    $region22: #{tpu_custom_call.1} parent=1 // pred_check
      _
    $region23: #{tpu_custom_call.1} parent=1 // pred_check_branch
      %207 = sbr.rel (0) target = $region25
    $region24: #{tpu_custom_call.1} parent=1 // pred_region
      %s209 = ssub.s32 128, 128
      %210 = vsyncadd [#allocation3], %s209
      %s212 = sshll.u32 [#allocation2], 4
      %s213 = int_to_ptr.vmem [resolvable:$true] %s212
      %215 = dma.vmem_to_hbm [thread:$0]  %s213, 128, %s5, [#allocation3]
    $region25: #{tpu_custom_call.1} parent=1 // pred_fallthru
      _
    // Predicated region
    $region26: #{tpu_custom_call.1} parent=1 // pred_check
      _
    $region27: #{tpu_custom_call.1} parent=1 // pred_check_branch
      %217 = sbr.rel (0) target = $region29
    $region28: #{tpu_custom_call.1} parent=1 // pred_region
      %218 = dma.done [#allocation3], 128
    $region29: #{tpu_custom_call.1} parent=1 // pred_fallthru
      _
    %219 = vsyncpa [#allocation3], 1

</llo_original>
